<compile_context>
chip_gen: v7x
topology: tpu7x:2x2x1
jax: 0.10.0
libtpu: 0.0.40
codegen_flags: <defaults>
</compile_context>

<pallas_src>
import functools

import jax
import jax.numpy as jnp
from jax import lax
from jax.experimental import pallas as pl
from jax.experimental.pallas import tpu as pltpu

EPS = 1e-5


def _round_up(n, m):
    return ((n + m - 1) // m) * m


def prenorm_kernel(x_ref, gamma_ref, beta_ref, w_ref, bias_ref, o_ref):
    # x_ref: (tile_rows, dim) tile of the flattened (batch*seq, dim) input.
    x = x_ref[...].astype(jnp.float32)

    # --- LayerNorm over the last axis (biased variance, like PyTorch) ---
    # Statistics always in f32, regardless of input dtype.
    mean = jnp.mean(x, axis=-1, keepdims=True)
    centered = x - mean
    var = jnp.mean(centered * centered, axis=-1, keepdims=True)
    inv_std = lax.rsqrt(var + EPS)
    # gamma/beta are pre-cast to f32 in the wrapper (no per-step astype).
    y = centered * inv_std * gamma_ref[...] + beta_ref[...]

    # --- fn: Linear(dim, dim) applied to the normalized activations ---
    # W is pre-cast to the MXU dtype (bf16 for bf16 inputs, f32 otherwise) in
    # the wrapper; only the activation is cast right before the dot.
    out = jnp.dot(y.astype(w_ref.dtype), w_ref[...],
                  preferred_element_type=jnp.float32)
    out = out + bias_ref[...]

    o_ref[...] = out.astype(o_ref.dtype)


@functools.partial(jax.jit, static_argnames=("tile_rows",))
def prenorm(x, gamma, beta, w, bias, *, tile_rows=512):
    """x: (batch, seq, dim) -> (batch, seq, dim)."""
    batch, seq, dim = x.shape
    rows = batch * seq
    out_dtype = x.dtype

    x_itemsize = jnp.dtype(x.dtype).itemsize
    # Sublane granularity for the row tile: 8 for 32-bit dtypes, 16 for 16-bit.
    sub = 16 if x_itemsize < 4 else 8

    # Pick the actual tile: big (default 512) but no bigger than the padded
    # row count, always a multiple of the sublane granularity.
    tr = min(tile_rows, _round_up(rows, sub))
    tr = max(sub, _round_up(tr, sub))
    rows_pad = _round_up(rows, tr)

    # --- one-time parameter preparation (hoisted out of the kernel) ---
    # bf16 inputs -> native bf16 x bf16 -> f32 MXU path; otherwise f32.
    mxu_dtype = jnp.bfloat16 if x.dtype == jnp.bfloat16 else jnp.float32
    w_prep = w.astype(mxu_dtype)
    gamma2d = gamma.astype(jnp.float32).reshape(1, dim)
    beta2d = beta.astype(jnp.float32).reshape(1, dim)
    bias2d = bias.astype(jnp.float32).reshape(1, dim)

    x2d = x.reshape(rows, dim)
    if rows_pad != rows:
        # Padded rows produce finite garbage that is sliced off below.
        x2d = jnp.pad(x2d, ((0, rows_pad - rows), (0, 0)))

    grid = (rows_pad // tr,)

    # Rough VMEM footprint: double-buffered x/out tiles + (possibly
    # double-buffered) resident weight + small params.
    out_itemsize = jnp.dtype(out_dtype).itemsize
    w_itemsize = jnp.dtype(mxu_dtype).itemsize
    vmem_est = (2 * tr * dim * (x_itemsize + out_itemsize)
                + 2 * dim * dim * w_itemsize
                + 8 * dim * 4)
    vmem_limit = None
    if vmem_est > 24 * 1024 * 1024:
        vmem_limit = min(int(vmem_est * 3 // 2), 120 * 1024 * 1024)

    out2d = pl.pallas_call(
        prenorm_kernel,
        out_shape=jax.ShapeDtypeStruct((rows_pad, dim), out_dtype),
        grid_spec=pltpu.PrefetchScalarGridSpec(
            num_scalar_prefetch=0,
            grid=grid,
            in_specs=[
                pl.BlockSpec((tr, dim), lambda i: (i, 0)),    # x tile
                pl.BlockSpec((1, dim), lambda i: (0, 0)),     # gamma (resident)
                pl.BlockSpec((1, dim), lambda i: (0, 0)),     # beta  (resident)
                pl.BlockSpec((dim, dim), lambda i: (0, 0)),   # W     (resident)
                pl.BlockSpec((1, dim), lambda i: (0, 0)),     # bias  (resident)
            ],
            out_specs=pl.BlockSpec((tr, dim), lambda i: (i, 0)),
        ),
        compiler_params=pltpu.CompilerParams(
            dimension_semantics=("parallel",),
            vmem_limit_bytes=vmem_limit,
        ),
    )(x2d, gamma2d, beta2d, w_prep, bias2d)

    if rows_pad != rows:
        out2d = out2d[:rows]
    return out2d.reshape(batch, seq, dim)


def prenorm_reference(x, gamma, beta, w, bias):
    xf = x.astype(jnp.float32)
    mean = jnp.mean(xf, axis=-1, keepdims=True)
    var = jnp.mean((xf - mean) ** 2, axis=-1, keepdims=True)
    xn = (xf - mean) * lax.rsqrt(var + EPS)
    y = xn * gamma.astype(jnp.float32) + beta.astype(jnp.float32)
    out = y @ w.astype(jnp.float32) + bias.astype(jnp.float32)
    return out.astype(x.dtype)


if __name__ == "__main__":
    key = jax.random.PRNGKey(0)
    kx, kw, kb, kx2 = jax.random.split(key, 4)

    dim = 128

    # LayerNorm params: PyTorch default init (ones / zeros).
    gamma = jnp.ones((dim,), jnp.float32)
    beta = jnp.zeros((dim,), jnp.float32)

    # fn = Linear(dim, dim): deterministic synthetic weights.
    w = jax.random.normal(kw, (dim, dim), dtype=jnp.float32) * 0.02
    bias = jax.random.normal(kb, (dim,), dtype=jnp.float32) * 0.01

    # Case 1: small f32 input (rows=16 -> single tile).
    batch, seq = 2, 8
    x = jax.random.normal(kx, (batch, seq, dim), dtype=jnp.float32)
    out = prenorm(x, gamma, beta, w, bias)
    jax.block_until_ready(out)
    ref = prenorm_reference(x, gamma, beta, w, bias)
    assert out.shape == (batch, seq, dim)
    assert jnp.allclose(out, ref, atol=1e-4, rtol=1e-4), "f32 mismatch vs reference"

    # Case 2: rows not divisible by the tile (exercises the padding path) and
    # bf16 input (exercises the native bf16 MXU path with f32 LN stats).
    batch2, seq2 = 3, 5  # rows = 15
    x2 = jax.random.normal(kx2, (batch2, seq2, dim), dtype=jnp.float32)
    out2 = prenorm(x2.astype(jnp.bfloat16), gamma, beta,
                   w.astype(jnp.bfloat16), bias)
    jax.block_until_ready(out2)
    ref2 = prenorm_reference(x2, gamma, beta, w, bias)
    assert out2.shape == (batch2, seq2, dim)
    assert jnp.allclose(out2.astype(jnp.float32), ref2,
                        atol=5e-2, rtol=5e-2), "bf16 mismatch vs reference"

    print("KERNEL_OK")
</pallas_src>

<mosaic_0001>
module attributes {stable_mosaic.version = 11 : i64} {
  func.func @prenorm_kernel(%arg0: i32, %arg1: memref<16x128xf32, #tpu.memory_space<vmem>>, %arg2: memref<1x128xf32, #tpu.memory_space<vmem>>, %arg3: memref<1x128xf32, #tpu.memory_space<vmem>>, %arg4: memref<128x128xf32, #tpu.memory_space<vmem>>, %arg5: memref<1x128xf32, #tpu.memory_space<vmem>>, %arg6: memref<16x128xf32, #tpu.memory_space<vmem>>) attributes {dimension_semantics = [#tpu.dimension_semantics<parallel>], iteration_bounds = array<i64: 1>, scalar_prefetch = 0 : i64, scratch_operands = 0 : i64, tpu.core_type = #tpu.core_type<tc>, window_params = [{transform_indices = @transform_0, window_bounds = array<i64: 16, 128>}, {pipeline_mode = #tpu.pipeline_mode<synchronous>, transform_indices = @transform_1, window_bounds = array<i64: 1, 128>}, {pipeline_mode = #tpu.pipeline_mode<synchronous>, transform_indices = @transform_2, window_bounds = array<i64: 1, 128>}, {pipeline_mode = #tpu.pipeline_mode<synchronous>, transform_indices = @transform_3, window_bounds = array<i64: 128, 128>}, {pipeline_mode = #tpu.pipeline_mode<synchronous>, transform_indices = @transform_4, window_bounds = array<i64: 1, 128>}, {transform_indices = @transform_5, window_bounds = array<i64: 16, 128>}]} {
    %c0 = arith.constant 0 : index
    %c0_0 = arith.constant 0 : index
    %0 = vector.load %arg1[%c0, %c0_0] : memref<16x128xf32, #tpu.memory_space<vmem>>, vector<16x128xf32>
    %cst = arith.constant dense<0.000000e+00> : vector<16xf32>
    %1 = vector.multi_reduction <add>, %0, %cst [1] : vector<16x128xf32> to vector<16xf32>
    %2 = vector.shape_cast %1 : vector<16xf32> to vector<16x1xf32>
    %cst_1 = arith.constant 1.280000e+02 : f32
    %3 = vector.broadcast %cst_1 : f32 to vector<16x1xf32>
    %4 = arith.divf %2, %3 : vector<16x1xf32>
    %5 = vector.broadcast %4 : vector<16x1xf32> to vector<16x128xf32>
    %6 = arith.subf %0, %5 : vector<16x128xf32>
    %7 = arith.mulf %6, %6 : vector<16x128xf32>
    %cst_2 = arith.constant dense<0.000000e+00> : vector<16xf32>
    %8 = vector.multi_reduction <add>, %7, %cst_2 [1] : vector<16x128xf32> to vector<16xf32>
    %9 = vector.shape_cast %8 : vector<16xf32> to vector<16x1xf32>
    %cst_3 = arith.constant 1.280000e+02 : f32
    %10 = vector.broadcast %cst_3 : f32 to vector<16x1xf32>
    %11 = arith.divf %9, %10 : vector<16x1xf32>
    %cst_4 = arith.constant 9.99999974E-6 : f32
    %12 = vector.broadcast %cst_4 : f32 to vector<16x1xf32>
    %13 = arith.addf %11, %12 : vector<16x1xf32>
    %14 = math.rsqrt %13 : vector<16x1xf32>
    %15 = vector.broadcast %14 : vector<16x1xf32> to vector<16x128xf32>
    %16 = arith.mulf %6, %15 : vector<16x128xf32>
    %c0_5 = arith.constant 0 : index
    %c0_6 = arith.constant 0 : index
    %17 = vector.load %arg2[%c0_5, %c0_6] : memref<1x128xf32, #tpu.memory_space<vmem>>, vector<1x128xf32>
    %18 = vector.broadcast %17 : vector<1x128xf32> to vector<16x128xf32>
    %19 = arith.mulf %16, %18 : vector<16x128xf32>
    %c0_7 = arith.constant 0 : index
    %c0_8 = arith.constant 0 : index
    %20 = vector.load %arg3[%c0_7, %c0_8] : memref<1x128xf32, #tpu.memory_space<vmem>>, vector<1x128xf32>
    %21 = vector.broadcast %20 : vector<1x128xf32> to vector<16x128xf32>
    %22 = arith.addf %19, %21 : vector<16x128xf32>
    %c0_9 = arith.constant 0 : index
    %c0_10 = arith.constant 0 : index
    %23 = vector.load %arg4[%c0_9, %c0_10] : memref<128x128xf32, #tpu.memory_space<vmem>>, vector<128x128xf32>
    %cst_11 = arith.constant dense<0.000000e+00> : vector<16x128xf32>
    %24 = tpu.matmul %22, %23, %cst_11 {dimension_numbers = #tpu.dot_dimension_numbers<[1], [0], [0], [1], [0, 0, 1, 1], [], []>} : vector<16x128xf32>, vector<128x128xf32>, vector<16x128xf32> -> vector<16x128xf32>
    %c0_12 = arith.constant 0 : index
    %c0_13 = arith.constant 0 : index
    %25 = vector.load %arg5[%c0_12, %c0_13] : memref<1x128xf32, #tpu.memory_space<vmem>>, vector<1x128xf32>
    %26 = vector.broadcast %25 : vector<1x128xf32> to vector<16x128xf32>
    %27 = arith.addf %24, %26 : vector<16x128xf32>
    %c0_14 = arith.constant 0 : index
    %c0_15 = arith.constant 0 : index
    %28 = vector.load %arg6[%c0_14, %c0_15] : memref<16x128xf32, #tpu.memory_space<vmem>>, vector<16x128xf32>
    tpu.vector_store %arg6[%c0_14, %c0_15], %27 {strides = array<i32>} : memref<16x128xf32, #tpu.memory_space<vmem>>, vector<16x128xf32>,
    return
  }
  func.func @transform_0(%arg0: i32) -> (i32, i32) {
    %c0_i32 = arith.constant 0 : i32
    %c0_i32_0 = arith.constant 0 : i32
    return %arg0, %c0_i32 : i32, i32
  }
  func.func @transform_1(%arg0: i32) -> (i32, i32) {
    %c0_i32 = arith.constant 0 : i32
    %c0_i32_0 = arith.constant 0 : i32
    %c0_i32_1 = arith.constant 0 : i32
    return %c0_i32, %c0_i32_0 : i32, i32
  }
  func.func @transform_2(%arg0: i32) -> (i32, i32) {
    %c0_i32 = arith.constant 0 : i32
    %c0_i32_0 = arith.constant 0 : i32
    %c0_i32_1 = arith.constant 0 : i32
    return %c0_i32, %c0_i32_0 : i32, i32
  }
  func.func @transform_3(%arg0: i32) -> (i32, i32) {
    %c0_i32 = arith.constant 0 : i32
    %c0_i32_0 = arith.constant 0 : i32
    %c0_i32_1 = arith.constant 0 : i32
    return %c0_i32, %c0_i32_0 : i32, i32
  }
  func.func @transform_4(%arg0: i32) -> (i32, i32) {
    %c0_i32 = arith.constant 0 : i32
    %c0_i32_0 = arith.constant 0 : i32
    %c0_i32_1 = arith.constant 0 : i32
    return %c0_i32, %c0_i32_0 : i32, i32
  }
  func.func @transform_5(%arg0: i32) -> (i32, i32) {
    %c0_i32 = arith.constant 0 : i32
    %c0_i32_0 = arith.constant 0 : i32
    return %arg0, %c0_i32 : i32, i32
  }
}

</mosaic_0001>

<llo_original>
// kernel: prenorm.1
$region0: #{prenorm.1}
  #allocation0 [shape = 'u32[]', space=smem, size = 0x4, offset = 0x4, fixed_abs, tag = 'smem constant byte address 0x4 - core index']
  #allocation1 [shape = 'u32[144,128]{1,0:T(1,128)}', space=vmem, size = 0x12000, scoped, tag = 'internal scratch']
  %s0 = inlined_call_operand.hbm [shape: f32[16,128], index: 0, kind: input, shape index: {}]
  %s1 = inlined_call_operand.vmem [shape: f32[1,128], index: 1, kind: input, shape index: {}]
  %s2 = inlined_call_operand.vmem [shape: f32[1,128], index: 2, kind: input, shape index: {}]
  %s3 = inlined_call_operand.hbm [shape: f32[128,128], index: 3, kind: input, shape index: {}]
  %s4 = inlined_call_operand.vmem [shape: f32[1,128], index: 4, kind: input, shape index: {}]
  %s5 = inlined_call_operand.hbm [shape: f32[16,128], index: 5, kind: output, shape index: {}]
  %s6 = sld [smem:[#allocation0]]
  $region38: #{prenorm.1} parent=0
    _
  %s8 = ssub.s32 1, %s6
  %s9 = scalar_select 0, %s8, %s6
  $region1: #{prenorm.1} parent=0
    #allocation2 [shape = 'u8[8192]{0}', space=vmem, size = 0x2000, scoped, tag = 'input window, operand 0, single buffered']
    #allocation3 [shape = 's32[1]{0}', space=sflag, size = 0x4, scoped, tag = 'scoped memory for prenorm.1']
    #allocation4 [shape = 's32[1]{0}', space=sflag, size = 0x4, scoped, tag = 'scoped memory for prenorm.1']
    #allocation5 [shape = 'u8[65536]{0}', space=vmem, size = 0x10000, scoped, tag = 'input window, operand 3, single buffered']
    #allocation6 [shape = 's32[1]{0}', space=sflag, size = 0x4, scoped, tag = 'scoped memory for prenorm.1']
    #allocation7 [shape = 'u8[8192]{0}', space=vmem, size = 0x2000, scoped, tag = 'output window, operand 0, single buffered']
    %10 = vsyncpa [#allocation3], 0
    %11 = vsyncpa [#allocation6], 0
    %12 = vsyncpa [#allocation4], 0
    // Predicated region
    $region2: #{prenorm.1} parent=1 // pred_check
      _
    $region3: #{prenorm.1} parent=1 // pred_check_branch
      %14 = sbr.rel (0) target = $region5
    $region4: #{prenorm.1} parent=1 // pred_region
      %s16 = ssub.s32 256, 256
      %17 = vsyncadd [#allocation3], %s16
      %s18 = sshll.u32 [#allocation2], 4
      %s19 = int_to_ptr.vmem [resolvable:$true] %s18
      %24 = dma.hbm_to_vmem [thread:$0]  %s0, 256, %s19, [#allocation3], 128, 128, 8
    $region5: #{prenorm.1} parent=1 // pred_fallthru
      _
    // Predicated region
    $region6: #{prenorm.1} parent=1 // pred_check
      _
    $region7: #{prenorm.1} parent=1 // pred_check_branch
      %26 = sbr.rel (0) target = $region9
    $region8: #{prenorm.1} parent=1 // pred_region
      _
    $region9: #{prenorm.1} parent=1 // pred_fallthru
      _
    // Predicated region
    $region10: #{prenorm.1} parent=1 // pred_check
      _
    $region11: #{prenorm.1} parent=1 // pred_check_branch
      %28 = sbr.rel (0) target = $region13
    $region12: #{prenorm.1} parent=1 // pred_region
      _
    $region13: #{prenorm.1} parent=1 // pred_fallthru
      _
    // Predicated region
    $region14: #{prenorm.1} parent=1 // pred_check
      _
    $region15: #{prenorm.1} parent=1 // pred_check_branch
      %30 = sbr.rel (0) target = $region17
    $region16: #{prenorm.1} parent=1 // pred_region
      %s32 = ssub.s32 2048, 2048
      %33 = vsyncadd [#allocation6], %s32
      %s34 = sshll.u32 [#allocation5], 4
      %s35 = int_to_ptr.vmem [resolvable:$true] %s34
      %40 = dma.hbm_to_vmem [thread:$0]  %s3, 2048, %s35, [#allocation6], 128, 128, 8
    $region17: #{prenorm.1} parent=1 // pred_fallthru
      _
    // Predicated region
    $region18: #{prenorm.1} parent=1 // pred_check
      _
    $region19: #{prenorm.1} parent=1 // pred_check_branch
      %42 = sbr.rel (0) target = $region21
    $region20: #{prenorm.1} parent=1 // pred_region
      _
    $region21: #{prenorm.1} parent=1 // pred_fallthru
      _
    // Predicated region
    $region22: #{prenorm.1} parent=1 // pred_check
      _
    $region23: #{prenorm.1} parent=1 // pred_check_branch
      %44 = sbr.rel (0) target = $region25
    $region24: #{prenorm.1} parent=1 // pred_region
      %45 = dma.done [#allocation3], 256
    $region25: #{prenorm.1} parent=1 // pred_fallthru
      _
    // Predicated region
    $region26: #{prenorm.1} parent=1 // pred_check
      _
    $region27: #{prenorm.1} parent=1 // pred_check_branch
      %47 = sbr.rel (0) target = $region29
    $region28: #{prenorm.1} parent=1 // pred_region
      %48 = dma.done [#allocation6], 2048
    $region29: #{prenorm.1} parent=1 // pred_fallthru
      _
    %v49 = vld [vmem:[#allocation2] sm:$0xff]
    %v50 = vld [vmem:[#allocation2 + $0x8] sm:$0xff]
    %51 = vadd.xlane.f32.xlu0 %v49
    %v52 = vpop.xlane.xlu0 %51
    %53 = vadd.xlane.f32.xlu0 %v50
    %v54 = vpop.xlane.xlu0 %53
    %v55 = vrcp.pop 128.0
    %v56 = vmul.f32 %v52, %v55
    %v57 = vmul.f32 %v54, %v55
    %v58 = vsub.f32 %v49, %v56
    %v59 = vsub.f32 %v50, %v57
    %v60 = vmul.f32 %v58, %v58
    %v61 = vmul.f32 %v59, %v59
    %62 = vadd.xlane.f32.xlu0 %v60
    %v63 = vpop.xlane.xlu0 %62
    %64 = vadd.xlane.f32.xlu0 %v61
    %v65 = vpop.xlane.xlu0 %64
    %v66 = vmul.f32 %v63, %v55
    %v67 = vmul.f32 %v65, %v55
    %v68 = vadd.f32 %v66, 1e-05
    %v69 = vadd.f32 %v67, 1e-05
    %v70 = vrsqrt.pop %v68
    %v71 = vrsqrt.pop %v69
    %v72 = vmul.f32 %v58, %v70
    %v73 = vmul.f32 %v59, %v71
    %v74 = vld [vmem:[%s1] sm:$0x1]
    %v76 = vlaneseq
    %v77 = vshrl.u32 %v76, 7
    %v78 = vsub.s32 0, %v77
    %v79 = vrot.slane %v74, %v78
    %v81 = vmul.f32 %v72, %v79
    %v82 = vmul.f32 %v73, %v79
    %v83 = vld [vmem:[%s2] sm:$0x1]
    %v85 = vlaneseq
    %v86 = vshrl.u32 %v85, 7
    %v87 = vsub.s32 0, %v86
    %v88 = vrot.slane %v83, %v87
    %v90 = vadd.f32 %v81, %v88
    %v91 = vadd.f32 %v82, %v88
    %v92 = vld [vmem:[#allocation5] sm:$0xff]
    %v93 = vld [vmem:[#allocation5 + $0x8] sm:$0xff]
    %v94 = vld [vmem:[#allocation5 + $0x10] sm:$0xff]
    %v95 = vld [vmem:[#allocation5 + $0x18] sm:$0xff]
    %v96 = vld [vmem:[#allocation5 + $0x20] sm:$0xff]
    %v97 = vld [vmem:[#allocation5 + $0x28] sm:$0xff]
    %v98 = vld [vmem:[#allocation5 + $0x30] sm:$0xff]
    %v99 = vld [vmem:[#allocation5 + $0x38] sm:$0xff]
    %v100 = vld [vmem:[#allocation5 + $0x40] sm:$0xff]
    %v101 = vld [vmem:[#allocation5 + $0x48] sm:$0xff]
    %v102 = vld [vmem:[#allocation5 + $0x50] sm:$0xff]
    %v103 = vld [vmem:[#allocation5 + $0x58] sm:$0xff]
    %v104 = vld [vmem:[#allocation5 + $0x60] sm:$0xff]
    %v105 = vld [vmem:[#allocation5 + $0x68] sm:$0xff]
    %v106 = vld [vmem:[#allocation5 + $0x70] sm:$0xff]
    %v107 = vld [vmem:[#allocation5 + $0x78] sm:$0xff]
    %v108 = vld [vmem:[%s4] sm:$0x1]
    %v110 = vlaneseq
    %v111 = vshrl.u32 %v110, 7
    %v112 = vsub.s32 0, %v111
    %v113 = vrot.slane %v108, %v112
    %115 = vmatprep.subr.mxu0 0.0
    %116 = vmatpush1.msra.mxu0 %v92
    %117 = vmatprep.subr.mxu0 0.0
    %118 = vmatpush1.msra.mxu0 %v93
    %119 = vmatprep.subr.mxu0 0.0
    %120 = vmatpush1.msra.mxu0 %v94
    %121 = vmatprep.subr.mxu0 0.0
    %122 = vmatpush1.msra.mxu0 %v95
    %123 = vmatprep.subr.mxu0 0.0
    %124 = vmatpush1.msra.mxu0 %v96
    %125 = vmatprep.subr.mxu0 0.0
    %126 = vmatpush1.msra.mxu0 %v97
    %127 = vmatprep.subr.mxu0 0.0
    %128 = vmatpush1.msra.mxu0 %v98
    %129 = vmatprep.subr.mxu0 0.0
    %130 = vmatpush1.msra.mxu0 %v99
    %131 = vmatprep.subr.mxu0 0.0
    %132 = vmatpush1.msra.mxu0 %v100
    %133 = vmatprep.subr.mxu0 0.0
    %134 = vmatpush1.msra.mxu0 %v101
    %135 = vmatprep.subr.mxu0 0.0
    %136 = vmatpush1.msra.mxu0 %v102
    %137 = vmatprep.subr.mxu0 0.0
    %138 = vmatpush1.msra.mxu0 %v103
    %139 = vmatprep.subr.mxu0 0.0
    %140 = vmatpush1.msra.mxu0 %v104
    %141 = vmatprep.subr.mxu0 0.0
    %142 = vmatpush1.msra.mxu0 %v105
    %143 = vmatprep.subr.mxu0 0.0
    %144 = vmatpush1.msra.mxu0 %v106
    %145 = vmatprep.subr.mxu0 0.0
    %146 = vmatpush1.msra.mxu0 %v107
    %147 = vmatprep.subr.mxu0 0.0
    %148 = vmatpush1.msra.mxu0 0.0
    %149 = vmatprep.subr.mxu0 0.0
    %150 = vmatpush1.msra.mxu0 0.0
    %151 = vmatprep.subr.mxu0 0.0
    %152 = vmatpush1.msra.mxu0 0.0
    %153 = vmatprep.subr.mxu0 0.0
    %154 = vmatpush1.msra.mxu0 0.0
    %155 = vmatprep.subr.mxu0 0.0
    %156 = vmatpush1.msra.mxu0 0.0
    %157 = vmatprep.subr.mxu0 0.0
    %158 = vmatpush1.msra.mxu0 0.0
    %159 = vmatprep.subr.mxu0 0.0
    %160 = vmatpush1.msra.mxu0 0.0
    %161 = vmatprep.subr.mxu0 0.0
    %162 = vmatpush1.msra.mxu0 0.0
    %163 = vmatprep.subr.mxu0 0.0
    %164 = vmatpush1.msra.mxu0 0.0
    %165 = vmatprep.subr.mxu0 0.0
    %166 = vmatpush1.msra.mxu0 0.0
    %167 = vmatprep.subr.mxu0 0.0
    %168 = vmatpush1.msra.mxu0 0.0
    %169 = vmatprep.subr.mxu0 0.0
    %170 = vmatpush1.msra.mxu0 0.0
    %171 = vmatprep.subr.mxu0 0.0
    %172 = vmatpush1.msra.mxu0 0.0
    %173 = vmatprep.subr.mxu0 0.0
    %174 = vmatpush1.msra.mxu0 0.0
    %175 = vmatprep.subr.mxu0 0.0
    %176 = vmatpush1.msra.mxu0 0.0
    %177 = vmatprep.subr.mxu0 0.0
    %178 = vmatpush1.msra.mxu0 0.0
    %179 = vmatprep.mubr.f32.mxu0 0.0
    %180 = vmatmul.mubr.f32.gmra.mrb[0].mxu0 %v90
    %v181 = vpop.f32.mrb[0].mxu0
    %v182 = vadd.f32 %v113, %v181
    %v183 = vpop.f32.mrb[0].mxu0
    %184 = vmatprep.mubr.f32.mxu0 0.0
    %185 = vmatmul.mubr.f32.gmra.mrb[0].mxu0 %v91
    %v186 = vpop.f32.mrb[0].mxu0
    %v187 = vadd.f32 %v113, %v186
    %v188 = vpop.f32.mrb[0].mxu0
    %189 = vdwg.mxu0
    %190 = vst [vmem:[#allocation7] sm:$0xff] %v182
    %191 = vst [vmem:[#allocation7 + $0x8] sm:$0xff] %v187
    // Predicated region
    $region30: #{prenorm.1} parent=1 // pred_check
      _
    $region31: #{prenorm.1} parent=1 // pred_check_branch
      %193 = sbr.rel (0) target = $region33
    $region32: #{prenorm.1} parent=1 // pred_region
      %s195 = ssub.s32 256, 256
      %196 = vsyncadd [#allocation4], %s195
      %s197 = sshll.u32 [#allocation7], 4
      %s198 = int_to_ptr.vmem [resolvable:$true] %s197
      %203 = dma.vmem_to_hbm [thread:$0]  %s198, 256, %s5, [#allocation4], 128, 128, 8
    $region33: #{prenorm.1} parent=1 // pred_fallthru
      _
    // Predicated region
    $region34: #{prenorm.1} parent=1 // pred_check
      _
    $region35: #{prenorm.1} parent=1 // pred_check_branch
      %205 = sbr.rel (0) target = $region37
    $region36: #{prenorm.1} parent=1 // pred_region
      %206 = dma.done [#allocation4], 256
    $region37: #{prenorm.1} parent=1 // pred_fallthru
      _
    %207 = vsyncpa [#allocation3], 1
    %208 = vsyncpa [#allocation6], 1
    %209 = vsyncpa [#allocation4], 1

</llo_original>
